<compile_context>
chip_gen: v7x
topology: tpu7x:2x2x1
jax: 0.10.0
libtpu: 0.0.40
codegen_flags: <defaults>
</compile_context>

<pallas_src>
import math

import jax
import jax.numpy as jnp
from jax.experimental import pallas as pl
from jax.experimental.pallas import tpu as pltpu


def _make_pos_encoding_kernel(B: int, D: int, ts: int, p_drop: float, training: bool):
    BD = B * D
    keep_prob = 1.0 - float(p_drop)
    use_dropout = bool(training) and p_drop > 0.0
    # Integer keep threshold on 24 random bits: P(keep) = keep_24 / 2**24.
    keep_24 = min(int(round(keep_prob * (1 << 24))), 1 << 24)
    inv_keep = (1.0 / keep_prob) if keep_prob > 0.0 else 0.0

    def kernel(seed_ref, x_ref, pe_ref, o_ref):
        # x_ref/o_ref: (ts, B*D) lane-dense view of (ts, B, D); pe_ref: (ts, D).
        pe = pe_ref[...]
        pe_b = pe if B == 1 else jnp.concatenate([pe] * B, axis=1)  # (ts, B*D)
        y = x_ref[...] + pe_b

        if use_dropout:
            # Stateless hash PRNG: murmur3-style finalizer of the *global* element
            # index mixed with the seed.  Pure integer VPU ops -> lowers on both
            # Mosaic and the CPU interpreter; integer threshold avoids the
            # uint->float convert + multiply of the previous version.
            row = jax.lax.broadcasted_iota(jnp.int32, (ts, BD), 0)
            col = jax.lax.broadcasted_iota(jnp.int32, (ts, BD), 1)
            row0 = pl.program_id(0) * ts
            idx = ((row + row0) * BD + col).astype(jnp.uint32)   # global flat index
            seed_u = seed_ref[0].astype(jnp.uint32)
            h = idx + seed_u * jnp.uint32(0x9E3779B1)
            h = h ^ (h >> 16)
            h = h * jnp.uint32(0x85EBCA6B)
            h = h ^ (h >> 13)
            h = h * jnp.uint32(0xC2B2AE35)
            h = h ^ (h >> 16)
            keep = (h >> 8) < jnp.uint32(keep_24)                # top 24 bits
            y = jnp.where(keep, y * jnp.asarray(inv_keep, y.dtype), jnp.zeros_like(y))

        o_ref[...] = y.astype(o_ref.dtype)

    return kernel


def _choose_row_tile(S: int, bytes_per_row: int, align: int) -> int:
    """Largest aligned row tile within ~4 MiB of x per block, preferring a divisor of S
    (no padding) or the whole sequence when it fits (single block)."""
    budget_rows = max(align, (4 << 20) // max(1, bytes_per_row))
    if S <= budget_rows:
        return S                                    # single block; full-dim exemption
    budget_rows = max(align, (budget_rows // align) * align)
    t = budget_rows
    while t >= align:
        if S % t == 0:
            return t                                # aligned divisor -> no pad / no slice
        t -= align
    return budget_rows                              # rare fallback: wrapper pads the tail


def positional_encoding(x, pe, *, p_drop=0.1, training=False, seed=0, ts=None):
    """x: (S, B, D); pe: (max_len, D).  Returns dropout(x + pe[:S], p=p_drop)."""
    S, B, D = x.shape
    max_len, d_pe = pe.shape
    if d_pe != D:
        raise ValueError("pe table embed dim must match x")
    if S > max_len:
        raise ValueError(f"sequence length {S} exceeds max_len {max_len}")

    dtype = x.dtype
    itemsize = jnp.dtype(dtype).itemsize
    BD = B * D
    align = 16 if itemsize == 2 else 8              # bf16 packs 16 rows / sublane group

    if ts is None:
        ts = _choose_row_tile(S, BD * itemsize, align)
    ts = int(ts)
    if ts != S:
        ts = max(align, (ts // align) * align)

    n_blocks = pl.cdiv(S, ts)
    S_pad = n_blocks * ts

    x2 = x.reshape(S, BD)                           # zero-copy lane-dense view
    pe_s = pe[:S].astype(dtype)
    if S_pad != S:                                  # rare fallback (S with no aligned divisor)
        x2 = jnp.pad(x2, ((0, S_pad - S), (0, 0)))
        pe_s = jnp.pad(pe_s, ((0, S_pad - S), (0, 0)))

    seed_arr = jnp.asarray([seed], dtype=jnp.int32)
    kernel = _make_pos_encoding_kernel(B, D, ts, p_drop, training)

    # Double-buffered live footprint: x block + out block + pe block.
    footprint = 2 * (2 * ts * BD + ts * D) * itemsize
    vmem_limit = int(min(max(2 * footprint, 32 << 20), 48 << 20))

    out = pl.pallas_call(
        kernel,
        out_shape=jax.ShapeDtypeStruct((S_pad, BD), dtype),
        grid_spec=pltpu.PrefetchScalarGridSpec(
            num_scalar_prefetch=1,                  # dropout seed lives in SMEM
            grid=(n_blocks,),
            in_specs=[
                pl.BlockSpec((ts, BD), lambda i, seed_ref: (i, 0)),   # x row tile
                pl.BlockSpec((ts, D), lambda i, seed_ref: (i, 0)),    # matching pe rows
            ],
            out_specs=pl.BlockSpec((ts, BD), lambda i, seed_ref: (i, 0)),
        ),
        compiler_params=pltpu.CompilerParams(
            dimension_semantics=("parallel",),      # independent row tiles -> megacore on v7x
            vmem_limit_bytes=vmem_limit,
        ),
    )(seed_arr, x2, pe_s)

    if S_pad != S:
        out = out[:S]
    return out.reshape(S, B, D)


def _build_pe_table(d_model: int, max_len: int) -> jnp.ndarray:
    """Mirrors the PyTorch module's __init__ buffer construction."""
    position = jnp.arange(max_len, dtype=jnp.float32)[:, None]
    div_term = jnp.exp(
        jnp.arange(0, d_model, 2, dtype=jnp.float32) * (-math.log(10000.0) / d_model)
    )
    pe = jnp.zeros((max_len, d_model), dtype=jnp.float32)
    pe = pe.at[:, 0::2].set(jnp.sin(position * div_term))
    if d_model % 2 != 0:
        pe = pe.at[:, 1::2].set(jnp.cos(position * div_term)[:, :-1])
    else:
        pe = pe.at[:, 1::2].set(jnp.cos(position * div_term))
    return pe


if __name__ == "__main__":
    S, B, D = 128, 2, 32          # sequence length, batch, d_model
    MAX_LEN = 512
    P_DROP = 0.1

    pe = _build_pe_table(D, MAX_LEN)
    x = jax.random.normal(jax.random.PRNGKey(0), (S, B, D), dtype=jnp.float32)

    # Eval path (dropout is identity) — exact check against the reference.
    y_eval = positional_encoding(x, pe, p_drop=P_DROP, training=False)
    jax.block_until_ready(y_eval)
    y_ref = x + pe[:S][:, None, :]
    assert jnp.allclose(y_eval, y_ref, atol=1e-6, rtol=1e-6)

    # Training path (fused dropout) — surviving elements equal (x+pe)/(1-p);
    # dropped fraction is roughly p.
    y_train = positional_encoding(x, pe, p_drop=P_DROP, training=True, seed=1234)
    jax.block_until_ready(y_train)
    kept = y_train != 0.0
    assert jnp.allclose(
        jnp.where(kept, y_train, 0.0),
        jnp.where(kept, y_ref / (1.0 - P_DROP), 0.0),
        atol=1e-5, rtol=1e-5,
    )
    drop_frac = float(jnp.mean((~kept).astype(jnp.float32)))
    assert 0.02 <= drop_frac <= 0.25, drop_frac

    print("KERNEL_OK")
</pallas_src>

<mosaic_0001>
module attributes {stable_mosaic.version = 11 : i64} {
  func.func @kernel(%arg0: i32, %arg1: memref<1xi32, #tpu.memory_space<smem>>, %arg2: memref<128x64xf32, #tpu.memory_space<vmem>>, %arg3: memref<128x32xf32, #tpu.memory_space<vmem>>, %arg4: memref<128x64xf32, #tpu.memory_space<vmem>>) attributes {dimension_semantics = [#tpu.dimension_semantics<parallel>], iteration_bounds = array<i64: 1>, scalar_prefetch = 1 : i64, scratch_operands = 0 : i64, tpu.core_type = #tpu.core_type<tc>, window_params = [{transform_indices = @transform_0, window_bounds = array<i64: 128, 64>}, {transform_indices = @transform_1, window_bounds = array<i64: 128, 32>}, {transform_indices = @transform_2, window_bounds = array<i64: 128, 64>}]} {
    %c0 = arith.constant 0 : index
    %c0_0 = arith.constant 0 : index
    %0 = vector.load %arg3[%c0, %c0_0] : memref<128x32xf32, #tpu.memory_space<vmem>>, vector<128x32xf32>
    %1 = tpu.concatenate %0, %0 in 1 : vector<128x32xf32>, vector<128x32xf32> -> vector<128x64xf32>
    %c0_1 = arith.constant 0 : index
    %c0_2 = arith.constant 0 : index
    %2 = vector.load %arg2[%c0_1, %c0_2] : memref<128x64xf32, #tpu.memory_space<vmem>>, vector<128x64xf32>
    %3 = arith.addf %2, %1 : vector<128x64xf32>
    %c0_3 = arith.constant 0 : index
    %c0_4 = arith.constant 0 : index
    %4 = vector.load %arg4[%c0_3, %c0_4] : memref<128x64xf32, #tpu.memory_space<vmem>>, vector<128x64xf32>
    tpu.vector_store %arg4[%c0_3, %c0_4], %3 {strides = array<i32>} : memref<128x64xf32, #tpu.memory_space<vmem>>, vector<128x64xf32>,
    return
  }
  func.func @transform_0(%arg0: i32, %arg1: memref<1xi32, #tpu.memory_space<smem>>) -> (i32, i32) {
    %c0_i32 = arith.constant 0 : i32
    %c0_i32_0 = arith.constant 0 : i32
    return %arg0, %c0_i32 : i32, i32
  }
  func.func @transform_1(%arg0: i32, %arg1: memref<1xi32, #tpu.memory_space<smem>>) -> (i32, i32) {
    %c0_i32 = arith.constant 0 : i32
    %c0_i32_0 = arith.constant 0 : i32
    return %arg0, %c0_i32 : i32, i32
  }
  func.func @transform_2(%arg0: i32, %arg1: memref<1xi32, #tpu.memory_space<smem>>) -> (i32, i32) {
    %c0_i32 = arith.constant 0 : i32
    %c0_i32_0 = arith.constant 0 : i32
    return %arg0, %c0_i32 : i32, i32
  }
}

</mosaic_0001>

<llo_original>
// kernel: tpu_custom_call.1
$region0: #{tpu_custom_call.1}
  #allocation0 [shape = 'u32[]', space=smem, size = 0x4, offset = 0x4, fixed_abs, tag = 'smem constant byte address 0x4 - core index']
  #allocation1 [shape = 'u32[144,128]{1,0:T(1,128)}', space=vmem, size = 0x12000, scoped, tag = 'internal scratch']
  #allocation2 [shape = 's32[1]{0}', space=sflag, size = 0x4, scoped, tag = 'scoped memory for tpu_custom_call.1']
  #allocation3 [shape = 's32[1]{0:T(128)S(6)}', space=smem, size = 0x200, scoped, tag = 'prefetched SMEM operand 0']
  %s0 = inlined_call_operand.<no memory space> [shape: s32[1], index: 0, kind: input, shape index: {}]
  %s1 = inlined_call_operand.vmem [shape: f32[128,64], index: 1, kind: input, shape index: {}]
  %s2 = inlined_call_operand.vmem [shape: f32[128,32], index: 2, kind: input, shape index: {}]
  %s3 = inlined_call_operand.vmem [shape: f32[128,64], index: 3, kind: output, shape index: {}]
  %s4 = sld [smem:[#allocation0]]
  $region18: #{tpu_custom_call.1} parent=0
    _
  %s6 = ssub.s32 1, %s4
  %s7 = scalar_select 0, %s6, %s4
  %8 = sst [smem:[#allocation3]] %s0
  // Predicated region
  $region2: #{tpu_custom_call.1} parent=0 // pred_check
    _
  $region3: #{tpu_custom_call.1} parent=0 // pred_check_branch
    %10 = sbr.rel (0) target = $region5
  $region4: #{tpu_custom_call.1} parent=0 // pred_region
    _
  $region5: #{tpu_custom_call.1} parent=0 // pred_fallthru
    _
  // Predicated region
  $region6: #{tpu_custom_call.1} parent=0 // pred_check
    _
  $region7: #{tpu_custom_call.1} parent=0 // pred_check_branch
    %12 = sbr.rel (0) target = $region9
  $region8: #{tpu_custom_call.1} parent=0 // pred_region
    _
  $region9: #{tpu_custom_call.1} parent=0 // pred_fallthru
    _
  %v13 = vld [vmem:[%s2] sm:$0xff]
  %v14 = vld [vmem:[%s2 + $0x8] sm:$0xff]
  %v15 = vld [vmem:[%s2 + $0x10] sm:$0xff]
  %v16 = vld [vmem:[%s2 + $0x18] sm:$0xff]
  %v17 = vld [vmem:[%s2 + $0x20] sm:$0xff]
  %v18 = vld [vmem:[%s2 + $0x28] sm:$0xff]
  %v19 = vld [vmem:[%s2 + $0x30] sm:$0xff]
  %v20 = vld [vmem:[%s2 + $0x38] sm:$0xff]
  %v21 = vld [vmem:[%s2 + $0x40] sm:$0xff]
  %v22 = vld [vmem:[%s2 + $0x48] sm:$0xff]
  %v23 = vld [vmem:[%s2 + $0x50] sm:$0xff]
  %v24 = vld [vmem:[%s2 + $0x58] sm:$0xff]
  %v25 = vld [vmem:[%s2 + $0x60] sm:$0xff]
  %v26 = vld [vmem:[%s2 + $0x68] sm:$0xff]
  %v27 = vld [vmem:[%s2 + $0x70] sm:$0xff]
  %v28 = vld [vmem:[%s2 + $0x78] sm:$0xff]
  %45 = vrot.lane.b32.xlu0 %v13, 32
  %v46 = vpop.permute.xlu0 %45
  %47 = vrot.lane.b32.xlu0 %v14, 32
  %v48 = vpop.permute.xlu0 %47
  %49 = vrot.lane.b32.xlu0 %v15, 32
  %v50 = vpop.permute.xlu0 %49
  %51 = vrot.lane.b32.xlu0 %v16, 32
  %v52 = vpop.permute.xlu0 %51
  %53 = vrot.lane.b32.xlu0 %v17, 32
  %v54 = vpop.permute.xlu0 %53
  %55 = vrot.lane.b32.xlu0 %v18, 32
  %v56 = vpop.permute.xlu0 %55
  %57 = vrot.lane.b32.xlu0 %v19, 32
  %v58 = vpop.permute.xlu0 %57
  %59 = vrot.lane.b32.xlu0 %v20, 32
  %v60 = vpop.permute.xlu0 %59
  %61 = vrot.lane.b32.xlu0 %v21, 32
  %v62 = vpop.permute.xlu0 %61
  %63 = vrot.lane.b32.xlu0 %v22, 32
  %v64 = vpop.permute.xlu0 %63
  %65 = vrot.lane.b32.xlu0 %v23, 32
  %v66 = vpop.permute.xlu0 %65
  %67 = vrot.lane.b32.xlu0 %v24, 32
  %v68 = vpop.permute.xlu0 %67
  %69 = vrot.lane.b32.xlu0 %v25, 32
  %v70 = vpop.permute.xlu0 %69
  %71 = vrot.lane.b32.xlu0 %v26, 32
  %v72 = vpop.permute.xlu0 %71
  %73 = vrot.lane.b32.xlu0 %v27, 32
  %v74 = vpop.permute.xlu0 %73
  %75 = vrot.lane.b32.xlu0 %v28, 32
  %v76 = vpop.permute.xlu0 %75
  %vm93 = vcmask 261120
  %v94 = vsel %vm93, %v13, %v46
  %v95 = vsel %vm93, %v14, %v48
  %v96 = vsel %vm93, %v15, %v50
  %v97 = vsel %vm93, %v16, %v52
  %v98 = vsel %vm93, %v17, %v54
  %v99 = vsel %vm93, %v18, %v56
  %v100 = vsel %vm93, %v19, %v58
  %v101 = vsel %vm93, %v20, %v60
  %v102 = vsel %vm93, %v21, %v62
  %v103 = vsel %vm93, %v22, %v64
  %v104 = vsel %vm93, %v23, %v66
  %v105 = vsel %vm93, %v24, %v68
  %v106 = vsel %vm93, %v25, %v70
  %v107 = vsel %vm93, %v26, %v72
  %v108 = vsel %vm93, %v27, %v74
  %v109 = vsel %vm93, %v28, %v76
  %v110 = vld [vmem:[%s1] sm:$0xff]
  %v111 = vld [vmem:[%s1 + $0x8] sm:$0xff]
  %v112 = vld [vmem:[%s1 + $0x10] sm:$0xff]
  %v113 = vld [vmem:[%s1 + $0x18] sm:$0xff]
  %v114 = vld [vmem:[%s1 + $0x20] sm:$0xff]
  %v115 = vld [vmem:[%s1 + $0x28] sm:$0xff]
  %v116 = vld [vmem:[%s1 + $0x30] sm:$0xff]
  %v117 = vld [vmem:[%s1 + $0x38] sm:$0xff]
  %v118 = vld [vmem:[%s1 + $0x40] sm:$0xff]
  %v119 = vld [vmem:[%s1 + $0x48] sm:$0xff]
  %v120 = vld [vmem:[%s1 + $0x50] sm:$0xff]
  %v121 = vld [vmem:[%s1 + $0x58] sm:$0xff]
  %v122 = vld [vmem:[%s1 + $0x60] sm:$0xff]
  %v123 = vld [vmem:[%s1 + $0x68] sm:$0xff]
  %v124 = vld [vmem:[%s1 + $0x70] sm:$0xff]
  %v125 = vld [vmem:[%s1 + $0x78] sm:$0xff]
  %v126 = vadd.f32 %v110, %v94
  %v127 = vadd.f32 %v111, %v95
  %v128 = vadd.f32 %v112, %v96
  %v129 = vadd.f32 %v113, %v97
  %v130 = vadd.f32 %v114, %v98
  %v131 = vadd.f32 %v115, %v99
  %v132 = vadd.f32 %v116, %v100
  %v133 = vadd.f32 %v117, %v101
  %v134 = vadd.f32 %v118, %v102
  %v135 = vadd.f32 %v119, %v103
  %v136 = vadd.f32 %v120, %v104
  %v137 = vadd.f32 %v121, %v105
  %v138 = vadd.f32 %v122, %v106
  %v139 = vadd.f32 %v123, %v107
  %v140 = vadd.f32 %v124, %v108
  %v141 = vadd.f32 %v125, %v109
  %vm142 = vcmask 523264
  %143 = vst.msk [vmem:[%s3] sm:$0xff] %vm142, %v126
  %144 = vst.msk [vmem:[%s3 + $0x8] sm:$0xff] %vm142, %v127
  %145 = vst.msk [vmem:[%s3 + $0x10] sm:$0xff] %vm142, %v128
  %146 = vst.msk [vmem:[%s3 + $0x18] sm:$0xff] %vm142, %v129
  %147 = vst.msk [vmem:[%s3 + $0x20] sm:$0xff] %vm142, %v130
  %148 = vst.msk [vmem:[%s3 + $0x28] sm:$0xff] %vm142, %v131
  %149 = vst.msk [vmem:[%s3 + $0x30] sm:$0xff] %vm142, %v132
  %150 = vst.msk [vmem:[%s3 + $0x38] sm:$0xff] %vm142, %v133
  %151 = vst.msk [vmem:[%s3 + $0x40] sm:$0xff] %vm142, %v134
  %152 = vst.msk [vmem:[%s3 + $0x48] sm:$0xff] %vm142, %v135
  %153 = vst.msk [vmem:[%s3 + $0x50] sm:$0xff] %vm142, %v136
  %154 = vst.msk [vmem:[%s3 + $0x58] sm:$0xff] %vm142, %v137
  %155 = vst.msk [vmem:[%s3 + $0x60] sm:$0xff] %vm142, %v138
  %156 = vst.msk [vmem:[%s3 + $0x68] sm:$0xff] %vm142, %v139
  %157 = vst.msk [vmem:[%s3 + $0x70] sm:$0xff] %vm142, %v140
  %158 = vst.msk [vmem:[%s3 + $0x78] sm:$0xff] %vm142, %v141
  // Predicated region
  $region10: #{tpu_custom_call.1} parent=0 // pred_check
    _
  $region11: #{tpu_custom_call.1} parent=0 // pred_check_branch
    %160 = sbr.rel (0) target = $region13
  $region12: #{tpu_custom_call.1} parent=0 // pred_region
    _
  $region13: #{tpu_custom_call.1} parent=0 // pred_fallthru
    _
  // Predicated region
  $region14: #{tpu_custom_call.1} parent=0 // pred_check
    _
  $region15: #{tpu_custom_call.1} parent=0 // pred_check_branch
    %162 = sbr.rel (0) target = $region17
  $region16: #{tpu_custom_call.1} parent=0 // pred_region
    _
  $region17: #{tpu_custom_call.1} parent=0 // pred_fallthru
    _

</llo_original>
